<compile_context>
chip_gen: v7x
topology: tpu7x:2x2x1
jax: 0.10.0
libtpu: 0.0.40
codegen_flags: <defaults>
</compile_context>

<pallas_src>
import functools

import jax
import jax.numpy as jnp
from jax.experimental import pallas as pl
from jax.experimental.pallas import tpu as pltpu


def _cdiv(a: int, b: int) -> int:
    return -(-a // b)


@functools.lru_cache(maxsize=1)
def _tpu_hw_info():
    """Best-effort, generation-aware hardware query with safe fallbacks."""
    vmem_cap = 64 << 20          # conservative default: v7x has the smallest VMEM
    kind = ""
    num_cores = 1
    try:
        d = jax.devices()[0]
        kind = (getattr(d, "device_kind", "") or "").lower()
    except Exception:
        pass
    try:
        info = pltpu.get_tpu_info()
        v = getattr(info, "vmem_capacity_bytes", None)
        if v:
            vmem_cap = int(v)
    except Exception:
        pass
    # Chips exposing >1 TensorCore per device: v4/v5p megacore, v7x (2 TCs/chip).
    if any(tag in kind for tag in ("v4", "v5p", "v7", "tpu7")):
        num_cores = 2
    return vmem_cap, kind, num_cores


def _default_block_target_bytes(vmem_cap: int, kind: str) -> int:
    """Per-input VMEM block target, sized per generation."""
    if vmem_cap <= (64 << 20):   # v7x-class (64 MiB VMEM): stay well under budget
        return 4 << 20
    if "v6" in kind:             # v6e: 128 MiB VMEM, 1.4 TB/s -> bigger tiles pay off
        return 8 << 20
    return 4 << 20               # v5e & unknown


def _admm_sq_accum_kernel(x_ref, z_ref, u_ref, o_ref, *,
                          rows, block_rows, blocks_per_core, need_mask):
    """Accumulate sublane-group partial sums of (x - z + u)^2 into o_ref.

    x/z/u refs: (block_rows, lanes) lane-dense tiles (native dtype, cast to f32
    here).  o_ref: (1, 8, lanes) f32 accumulator, resident in VMEM across the
    inner ("arbitrary") grid axis of this core.
    """
    core = pl.program_id(0)
    step = pl.program_id(1)

    @pl.when(step == 0)
    def _():
        o_ref[...] = jnp.zeros_like(o_ref)

    d = (x_ref[...].astype(jnp.float32)
         - z_ref[...].astype(jnp.float32)
         + u_ref[...].astype(jnp.float32))
    dd = d * d

    if need_mask:
        # Zero rows past the end of the flat view.  Covers both the ragged
        # final block (partial out-of-bounds read = garbage) and padded
        # per-core block slots (valid <= 0 -> fully masked).
        row_start = (core * blocks_per_core + step) * block_rows
        valid = rows - row_start
        row_ids = jax.lax.broadcasted_iota(jnp.int32, dd.shape, 0)
        dd = jnp.where(row_ids < valid, dd, 0.0)

    # (R, L) -> (R//8, 8, L) is a layout-trivial split of the major axis; the
    # axis-0 sum is plain vreg adds (VPU), so the accumulator stays one
    # sublane group instead of a full input-sized block.
    lanes = dd.shape[-1]
    partial = jnp.sum(dd.reshape(-1, 8, lanes), axis=0)
    o_ref[...] += partial[None, :, :]


def admm_consistency_loss(x, z, u, rho=1.0, *,
                          lanes: int = 512,
                          block_rows=None,
                          num_cores=None,
                          min_kernel_elements: int = (1 << 20)):
    """ADMM consistency loss (rho/2) * ||x - z + u||^2 via a Pallas TPU kernel.

    x: [N, H, W]; z, u: stacked [N, H, W] arrays or python lists of per-sample
    [H, W] arrays (mirroring the PyTorch module, which stacks them).
    """
    if isinstance(z, (list, tuple)):
        z = jnp.stack(list(z), axis=0)
    if isinstance(u, (list, tuple)):
        u = jnp.stack(list(u), axis=0)

    assert x.ndim == 3, f"x must have shape [N, H, W], got {x.shape}"
    assert z.shape == x.shape, f"z mismatch: {z.shape} vs {x.shape}"
    assert u.shape == x.shape, f"u mismatch: {u.shape} vs {x.shape}"

    total = int(x.size)
    rho_half = jnp.asarray(rho, jnp.float32) * 0.5  # python floats & traced rho

    def _fallback():
        d = (x.astype(jnp.float32) - z.astype(jnp.float32)
             + u.astype(jnp.float32))
        return rho_half * jnp.sum(d * d)

    # Tiny problems: XLA's fused elementwise+reduce is as fast; skip the kernel.
    if total == 0 or total < min_kernel_elements:
        return _fallback()

    itemsizes = [jnp.dtype(a.dtype).itemsize for a in (x, z, u)]
    # Sublane multiple per packed dtype: f32 -> 8, bf16 -> 16, int8/fp8 -> 32.
    sub_mult = max(max(8, 32 // its) for its in itemsizes)

    # Lane-dense flat view: largest lane width (multiple of 128) that exactly
    # divides the element count, so the reshape is a pure bitcast (no copy).
    lane_candidates = [c for c in (1024, 512, 256, 128) if c <= max(int(lanes), 128)]
    if not lane_candidates:
        lane_candidates = [128]
    lanes_eff = None
    for cand in lane_candidates:
        if total % cand == 0 and (total // cand) >= sub_mult:
            lanes_eff = cand
            break
    if lanes_eff is None:
        # No copy-free lane-dense view exists (element count not a multiple of
        # 128, or too few rows); a padded kernel path would re-copy all three
        # inputs through HBM, so use XLA's fused reduce instead.
        return _fallback()

    rows = total // lanes_eff

    vmem_cap, kind, detected_cores = _tpu_hw_info()
    if num_cores is None:
        num_cores = detected_cores
    num_cores = max(1, int(num_cores))

    if block_rows is None:
        target_bytes = _default_block_target_bytes(vmem_cap, kind)
        block_rows = max(sub_mult, target_bytes // (lanes_eff * max(itemsizes)))
    block_rows_eff = max(sub_mult, (int(block_rows) // sub_mult) * sub_mult)
    block_rows_eff = min(block_rows_eff, (rows // sub_mult) * sub_mult)

    total_blocks = _cdiv(rows, block_rows_eff)
    num_cores_eff = max(1, min(num_cores, total_blocks))
    blocks_per_core = _cdiv(total_blocks, num_cores_eff)
    need_mask = (num_cores_eff * blocks_per_core * block_rows_eff) != rows

    # Free bitcast reshapes of the contiguous inputs (native dtype preserved).
    xf = x.reshape(rows, lanes_eff)
    zf = z.reshape(rows, lanes_eff)
    uf = u.reshape(rows, lanes_eff)

    last_block = total_blocks - 1

    def in_index_map(c, i):
        # Clamp padded (fully out-of-range) block slots onto a valid block;
        # their contribution is masked to zero inside the kernel.
        g = jnp.minimum(c * blocks_per_core + i, last_block)
        return (g, 0)

    in_spec = pl.BlockSpec((block_rows_eff, lanes_eff), in_index_map)
    out_spec = pl.BlockSpec((1, 8, lanes_eff), lambda c, i: (c, 0, 0))

    # Explicit VMEM budget: 3 inputs x 2 pipeline buffers + tiny accumulator
    # + slack, clamped below the detected per-core VMEM capacity.
    in_block_bytes = sum(block_rows_eff * lanes_eff * its for its in itemsizes)
    acc_bytes = num_cores_eff * 8 * lanes_eff * 4
    vmem_limit = 2 * in_block_bytes + 2 * acc_bytes + (4 << 20)
    vmem_limit = int(min(max(vmem_limit, 16 << 20),
                         max(24 << 20, vmem_cap - (12 << 20))))

    cost = pl.CostEstimate(
        flops=4 * total,
        transcendentals=0,
        bytes_accessed=int(sum(total * its for its in itemsizes) + acc_bytes),
    )

    kernel = functools.partial(
        _admm_sq_accum_kernel,
        rows=rows, block_rows=block_rows_eff,
        blocks_per_core=blocks_per_core, need_mask=need_mask)

    partial_sums = pl.pallas_call(
        kernel,
        out_shape=jax.ShapeDtypeStruct((num_cores_eff, 8, lanes_eff), jnp.float32),
        grid_spec=pltpu.PrefetchScalarGridSpec(
            num_scalar_prefetch=0,
            grid=(num_cores_eff, blocks_per_core),
            in_specs=[in_spec, in_spec, in_spec],
            out_specs=out_spec,
        ),
        compiler_params=pltpu.CompilerParams(
            dimension_semantics=("parallel", "arbitrary"),
            vmem_limit_bytes=vmem_limit,
        ),
        cost_estimate=cost,
    )(xf, zf, uf)

    # Single tiny cross-lane reduction + rho/2 scale outside the kernel.
    return rho_half * jnp.sum(partial_sums)


class AdmmConsistencyLoss:
    """Thin mirror of the PyTorch module's forward(x, admm_vars)."""

    def __init__(self, rho: float = 1.0, **loss_kwargs):
        self.rho = rho
        self.loss_kwargs = loss_kwargs

    def __call__(self, x, admm_vars):
        z = admm_vars["z_admm"]
        u = admm_vars["u_admm"]
        assert x.ndim == 3, f"x must have shape [N, H, W], got {x.shape}"
        assert len(z) == x.shape[0], f"z mismatch: len(z)={len(z)} vs {x.shape[0]}"
        assert len(u) == x.shape[0], f"u mismatch: len(u)={len(u)} vs {x.shape[0]}"
        return admm_consistency_loss(x, z, u, rho=self.rho, **self.loss_kwargs)


def _reference(x, z_stack, u_stack, rho=1.0):
    diff = (x.astype(jnp.float32) - z_stack.astype(jnp.float32)
            + u_stack.astype(jnp.float32))
    return (rho / 2.0) * jnp.sum(diff * diff)


if __name__ == "__main__":
    key = jax.random.PRNGKey(0)
    ks = jax.random.split(key, 12)

    # --- Test 1: module-style call (z/u as per-sample lists), small shape. ---
    # total = 1024 -> lanes 128, rows 8, single clean block (no masking).
    N, H, W = 4, 16, 16
    x1 = jax.random.normal(ks[0], (N, H, W), dtype=jnp.float32)
    z1 = list(jax.random.normal(ks[1], (N, H, W), dtype=jnp.float32))
    u1 = list(jax.random.normal(ks[2], (N, H, W), dtype=jnp.float32))
    loss_mod = AdmmConsistencyLoss(rho=1.7, min_kernel_elements=0)
    out1 = jax.block_until_ready(loss_mod(x1, {"z_admm": z1, "u_admm": u1}))
    ref1 = _reference(x1, jnp.stack(z1), jnp.stack(u1), rho=1.7)
    assert jnp.allclose(out1, ref1, rtol=1e-5, atol=1e-4), (out1, ref1)

    # --- Test 2: ragged rows + multi-block accumulation + 2-core clamp. ------
    # total = 9216 -> lanes 512, rows 18; block_rows 8 -> 3 blocks, last ragged;
    # num_cores=2 -> one padded block slot that is clamped and fully masked.
    N2, H2, W2 = 3, 24, 128
    x2 = jax.random.normal(ks[3], (N2, H2, W2), dtype=jnp.float32)
    z2 = jax.random.normal(ks[4], (N2, H2, W2), dtype=jnp.float32)
    u2 = jax.random.normal(ks[5], (N2, H2, W2), dtype=jnp.float32)
    out2 = jax.block_until_ready(
        admm_consistency_loss(x2, z2, u2, rho=0.5, block_rows=8, num_cores=2,
                              min_kernel_elements=0))
    ref2 = _reference(x2, z2, u2, rho=0.5)
    assert jnp.allclose(out2, ref2, rtol=1e-5, atol=1e-4), (out2, ref2)

    # --- Test 3: bf16 inputs (16-row sublane multiple), jitted, auto blocks. --
    N3, H3, W3 = 2, 64, 64
    x3 = jax.random.normal(ks[6], (N3, H3, W3), jnp.float32).astype(jnp.bfloat16)
    z3 = jax.random.normal(ks[7], (N3, H3, W3), jnp.float32).astype(jnp.bfloat16)
    u3 = jax.random.normal(ks[8], (N3, H3, W3), jnp.float32).astype(jnp.bfloat16)
    f = jax.jit(functools.partial(admm_consistency_loss, rho=2.0,
                                  min_kernel_elements=0))
    out3 = jax.block_until_ready(f(x3, z3, u3))
    ref3 = _reference(x3, z3, u3, rho=2.0)
    assert jnp.allclose(out3, ref3, rtol=1e-4, atol=1e-3), (out3, ref3)

    # --- Test 4: element count not a multiple of 128 -> fused-XLA fallback. ---
    x4 = jax.random.normal(ks[9], (2, 5, 7), dtype=jnp.float32)
    z4 = jax.random.normal(ks[10], (2, 5, 7), dtype=jnp.float32)
    u4 = jax.random.normal(ks[11], (2, 5, 7), dtype=jnp.float32)
    out4 = jax.block_until_ready(
        admm_consistency_loss(x4, z4, u4, rho=3.0, min_kernel_elements=0))
    ref4 = _reference(x4, z4, u4, rho=3.0)
    assert jnp.allclose(out4, ref4, rtol=1e-5, atol=1e-4), (out4, ref4)

    print("KERNEL_OK")
</pallas_src>

<mosaic_0001>
module attributes {stable_mosaic.version = 11 : i64} {
  func.func @_admm_sq_accum_kernel(%arg0: i32, %arg1: i32, %arg2: memref<8x128xf32, #tpu.memory_space<vmem>>, %arg3: memref<8x128xf32, #tpu.memory_space<vmem>>, %arg4: memref<8x128xf32, #tpu.memory_space<vmem>>, %arg5: memref<1x8x128xf32, #tpu.memory_space<vmem>>) attributes {dimension_semantics = [#tpu.dimension_semantics<parallel>, #tpu.dimension_semantics<arbitrary>], iteration_bounds = array<i64: 1, 1>, scalar_prefetch = 0 : i64, scratch_operands = 0 : i64, tpu.core_type = #tpu.core_type<tc>, window_params = [{transform_indices = @transform_0, window_bounds = array<i64: 8, 128>}, {transform_indices = @transform_1, window_bounds = array<i64: 8, 128>}, {transform_indices = @transform_2, window_bounds = array<i64: 8, 128>}, {transform_indices = @transform_3, window_bounds = array<i64: 1, 8, 128>}]} {
    %c0_i32 = arith.constant 0 : i32
    %0 = arith.cmpi eq, %arg1, %c0_i32 : i32
    %1 = arith.extui %0 : i1 to i32
    %c0_i32_0 = arith.constant 0 : i32
    %2 = arith.cmpi ne, %1, %c0_i32_0 : i32
    scf.if %2 {
      %cst_12 = arith.constant 0.000000e+00 : f32
      %15 = vector.broadcast %cst_12 : f32 to vector<1x8x128xf32>
      %c0_13 = arith.constant 0 : index
      %c0_14 = arith.constant 0 : index
      %c0_15 = arith.constant 0 : index
      %16 = vector.load %arg5[%c0_13, %c0_14, %c0_15] : memref<1x8x128xf32, #tpu.memory_space<vmem>>, vector<1x8x128xf32>
      tpu.vector_store %arg5[%c0_13, %c0_14, %c0_15], %15 {strides = array<i32>} : memref<1x8x128xf32, #tpu.memory_space<vmem>>, vector<1x8x128xf32>,
    } else {
    }
    %c0 = arith.constant 0 : index
    %c0_1 = arith.constant 0 : index
    %3 = vector.load %arg2[%c0, %c0_1] : memref<8x128xf32, #tpu.memory_space<vmem>>, vector<8x128xf32>
    %c0_2 = arith.constant 0 : index
    %c0_3 = arith.constant 0 : index
    %4 = vector.load %arg3[%c0_2, %c0_3] : memref<8x128xf32, #tpu.memory_space<vmem>>, vector<8x128xf32>
    %5 = arith.subf %3, %4 : vector<8x128xf32>
    %c0_4 = arith.constant 0 : index
    %c0_5 = arith.constant 0 : index
    %6 = vector.load %arg4[%c0_4, %c0_5] : memref<8x128xf32, #tpu.memory_space<vmem>>, vector<8x128xf32>
    %7 = arith.addf %5, %6 : vector<8x128xf32>
    %8 = arith.mulf %7, %7 : vector<8x128xf32>
    %9 = vector.shape_cast %8 : vector<8x128xf32> to vector<1x8x128xf32>
    %cst = arith.constant dense<0.000000e+00> : vector<8x128xf32>
    %10 = vector.multi_reduction <add>, %9, %cst [0] : vector<1x8x128xf32> to vector<8x128xf32>
    %c0_6 = arith.constant 0 : index
    %c0_7 = arith.constant 0 : index
    %c0_8 = arith.constant 0 : index
    %11 = vector.load %arg5[%c0_6, %c0_7, %c0_8] : memref<1x8x128xf32, #tpu.memory_space<vmem>>, vector<1x8x128xf32>
    %12 = vector.shape_cast %10 : vector<8x128xf32> to vector<1x8x128xf32>
    %13 = arith.addf %11, %12 : vector<1x8x128xf32>
    %c0_9 = arith.constant 0 : index
    %c0_10 = arith.constant 0 : index
    %c0_11 = arith.constant 0 : index
    %14 = vector.load %arg5[%c0_9, %c0_10, %c0_11] : memref<1x8x128xf32, #tpu.memory_space<vmem>>, vector<1x8x128xf32>
    tpu.vector_store %arg5[%c0_9, %c0_10, %c0_11], %13 {strides = array<i32>} : memref<1x8x128xf32, #tpu.memory_space<vmem>>, vector<1x8x128xf32>,
    return
  }
  func.func @transform_0(%arg0: i32, %arg1: i32) -> (i32, i32) {
    %c1_i32 = arith.constant 1 : i32
    %0 = arith.muli %arg0, %c1_i32 : i32
    %1 = arith.addi %0, %arg1 : i32
    %c0_i32 = arith.constant 0 : i32
    %2 = arith.minsi %1, %c0_i32 : i32
    %c0_i32_0 = arith.constant 0 : i32
    %c0_i32_1 = arith.constant 0 : i32
    return %2, %c0_i32_0 : i32, i32
  }
  func.func @transform_1(%arg0: i32, %arg1: i32) -> (i32, i32) {
    %c1_i32 = arith.constant 1 : i32
    %0 = arith.muli %arg0, %c1_i32 : i32
    %1 = arith.addi %0, %arg1 : i32
    %c0_i32 = arith.constant 0 : i32
    %2 = arith.minsi %1, %c0_i32 : i32
    %c0_i32_0 = arith.constant 0 : i32
    %c0_i32_1 = arith.constant 0 : i32
    return %2, %c0_i32_0 : i32, i32
  }
  func.func @transform_2(%arg0: i32, %arg1: i32) -> (i32, i32) {
    %c1_i32 = arith.constant 1 : i32
    %0 = arith.muli %arg0, %c1_i32 : i32
    %1 = arith.addi %0, %arg1 : i32
    %c0_i32 = arith.constant 0 : i32
    %2 = arith.minsi %1, %c0_i32 : i32
    %c0_i32_0 = arith.constant 0 : i32
    %c0_i32_1 = arith.constant 0 : i32
    return %2, %c0_i32_0 : i32, i32
  }
  func.func @transform_3(%arg0: i32, %arg1: i32) -> (i32, i32, i32) {
    %c0_i32 = arith.constant 0 : i32
    %c0_i32_0 = arith.constant 0 : i32
    %c0_i32_1 = arith.constant 0 : i32
    return %arg0, %c0_i32, %c0_i32_0 : i32, i32, i32
  }
}

</mosaic_0001>

<llo_original>
// kernel: tpu_custom_call.1
$region0: #{tpu_custom_call.1}
  #allocation0 [shape = 'u32[]', space=smem, size = 0x4, offset = 0x4, fixed_abs, tag = 'smem constant byte address 0x4 - core index']
  #allocation1 [shape = 'u32[144,128]{1,0:T(1,128)}', space=vmem, size = 0x12000, scoped, tag = 'internal scratch']
  %s0 = inlined_call_operand.hbm [shape: f32[8,128], index: 0, kind: input, shape index: {}]
  %s1 = inlined_call_operand.hbm [shape: f32[8,128], index: 1, kind: input, shape index: {}]
  %s2 = inlined_call_operand.hbm [shape: f32[8,128], index: 2, kind: input, shape index: {}]
  %s3 = inlined_call_operand.hbm [shape: f32[1,8,128], index: 3, kind: output, shape index: {}]
  %s4 = sld [smem:[#allocation0]]
  $region38: #{tpu_custom_call.1} parent=0
    _
  %s6 = ssub.s32 1, %s4
  %s7 = scalar_select 0, %s6, %s4
  $region1: #{tpu_custom_call.1} parent=0
    #allocation2 [shape = 'u8[4096]{0}', space=vmem, size = 0x1000, scoped, tag = 'input window, operand 0, single buffered']
    #allocation3 [shape = 's32[1]{0}', space=sflag, size = 0x4, scoped, tag = 'scoped memory for tpu_custom_call.1']
    #allocation4 [shape = 's32[1]{0}', space=sflag, size = 0x4, scoped, tag = 'scoped memory for tpu_custom_call.1']
    #allocation5 [shape = 'u8[4096]{0}', space=vmem, size = 0x1000, scoped, tag = 'input window, operand 1, single buffered']
    #allocation6 [shape = 's32[1]{0}', space=sflag, size = 0x4, scoped, tag = 'scoped memory for tpu_custom_call.1']
    #allocation7 [shape = 'u8[4096]{0}', space=vmem, size = 0x1000, scoped, tag = 'input window, operand 2, single buffered']
    #allocation8 [shape = 'u8[4096]{0}', space=vmem, size = 0x1000, scoped, tag = 'output window, operand 0, single buffered']
    %8 = vsyncpa [#allocation3], 0
    %9 = vsyncpa [#allocation6], 0
    %10 = vsyncpa [#allocation4], 0
    // Predicated region
    $region2: #{tpu_custom_call.1} parent=1 // pred_check
      _
    $region3: #{tpu_custom_call.1} parent=1 // pred_check_branch
      %12 = sbr.rel (0) target = $region5
    $region4: #{tpu_custom_call.1} parent=1 // pred_region
      %s13 = sadd.s32 0, 0
      %p14 = scmp.lt.s32.totalorder %s13, 0
      %s15 = scalar_select %p14, %s13, 0
      %s17 = ssub.s32 128, 128
      %18 = vsyncadd [#allocation3], %s17
      %s19 = smul.addr %s15, 128
      %s20 = scalar_lea.hbm %s0, %s19
      %s22 = sshll.u32 [#allocation2], 4
      %s23 = int_to_ptr.vmem [resolvable:$true] %s22
      %25 = dma.hbm_to_vmem [thread:$0]  %s20, 128, %s23, [#allocation3]
    $region5: #{tpu_custom_call.1} parent=1 // pred_fallthru
      _
    // Predicated region
    $region6: #{tpu_custom_call.1} parent=1 // pred_check
      _
    $region7: #{tpu_custom_call.1} parent=1 // pred_check_branch
      %27 = sbr.rel (0) target = $region9
    $region8: #{tpu_custom_call.1} parent=1 // pred_region
      %s28 = sadd.s32 0, 0
      %p29 = scmp.lt.s32.totalorder %s28, 0
      %s30 = scalar_select %p29, %s28, 0
      %s32 = ssub.s32 128, 128
      %33 = vsyncadd [#allocation6], %s32
      %s34 = smul.addr %s30, 128
      %s35 = scalar_lea.hbm %s1, %s34
      %s37 = sshll.u32 [#allocation5], 4
      %s38 = int_to_ptr.vmem [resolvable:$true] %s37
      %40 = dma.hbm_to_vmem [thread:$0]  %s35, 128, %s38, [#allocation6]
    $region9: #{tpu_custom_call.1} parent=1 // pred_fallthru
      _
    // Predicated region
    $region10: #{tpu_custom_call.1} parent=1 // pred_check
      _
    $region11: #{tpu_custom_call.1} parent=1 // pred_check_branch
      %42 = sbr.rel (0) target = $region13
    $region12: #{tpu_custom_call.1} parent=1 // pred_region
      %s43 = sadd.s32 0, 0
      %p44 = scmp.lt.s32.totalorder %s43, 0
      %s45 = scalar_select %p44, %s43, 0
      %s47 = ssub.s32 128, 128
      %48 = vsyncadd [#allocation6], %s47
      %s49 = smul.addr %s45, 128
      %s50 = scalar_lea.hbm %s2, %s49
      %s52 = sshll.u32 [#allocation7], 4
      %s53 = int_to_ptr.vmem [resolvable:$true] %s52
      %55 = dma.hbm_to_vmem [thread:$0]  %s50, 128, %s53, [#allocation6]
    $region13: #{tpu_custom_call.1} parent=1 // pred_fallthru
      _
    // Predicated region
    $region14: #{tpu_custom_call.1} parent=1 // pred_check
      _
    $region15: #{tpu_custom_call.1} parent=1 // pred_check_branch
      %57 = sbr.rel (0) target = $region17
    $region16: #{tpu_custom_call.1} parent=1 // pred_region
      %58 = dma.done [#allocation3], 128
    $region17: #{tpu_custom_call.1} parent=1 // pred_fallthru
      _
    // Predicated region
    $region18: #{tpu_custom_call.1} parent=1 // pred_check
      _
    $region19: #{tpu_custom_call.1} parent=1 // pred_check_branch
      %60 = sbr.rel (0) target = $region21
    $region20: #{tpu_custom_call.1} parent=1 // pred_region
      %61 = dma.done [#allocation6], 128
    $region21: #{tpu_custom_call.1} parent=1 // pred_fallthru
      _
    // Predicated region
    $region22: #{tpu_custom_call.1} parent=1 // pred_check
      _
    $region23: #{tpu_custom_call.1} parent=1 // pred_check_branch
      %63 = sbr.rel (0) target = $region25
    $region24: #{tpu_custom_call.1} parent=1 // pred_region
      %64 = dma.done [#allocation6], 128
    $region25: #{tpu_custom_call.1} parent=1 // pred_fallthru
      _
    %s65 = sadd.s32 0, 0
    %p66 = scmp.lt.s32.totalorder %s65, 0
    %s67 = scalar_select %p66, %s65, 0
    %s68 = sadd.s32 0, 0
    %p69 = scmp.lt.s32.totalorder %s68, 0
    %s70 = scalar_select %p69, %s68, 0
    %s71 = sadd.s32 0, 0
    %p72 = scmp.lt.s32.totalorder %s71, 0
    %s73 = scalar_select %p72, %s71, 0
    %p74 = scmp.eq.s32.totalorder 0, 0
    // Predicated region
    $region26: #{tpu_custom_call.1} parent=1 // pred_check
      %p75 = pneg %p74
    $region27: #{tpu_custom_call.1} parent=1 // pred_check_branch
      %77 = sbr.rel (%p75) target = $region29
    $region28: #{tpu_custom_call.1} parent=1 // pred_region
      %78 = vst [vmem:[#allocation8] sm:$0xff] 0.0
    $region29: #{tpu_custom_call.1} parent=1 // pred_fallthru
      _
    %v79 = vld [vmem:[#allocation2] sm:$0xff]
    %v80 = vld [vmem:[#allocation5] sm:$0xff]
    %v81 = vsub.f32 %v79, %v80
    %v82 = vld [vmem:[#allocation7] sm:$0xff]
    %v83 = vadd.f32 %v81, %v82
    %v84 = vmul.f32 %v83, %v83
    %v85 = vadd.f32 %v84, 0.0
    %v86 = vld [vmem:[#allocation8] sm:$0xff]
    %v87 = vadd.f32 %v86, %v85
    %88 = vst [vmem:[#allocation8] sm:$0xff] %v87
    // Predicated region
    $region30: #{tpu_custom_call.1} parent=1 // pred_check
      _
    $region31: #{tpu_custom_call.1} parent=1 // pred_check_branch
      %90 = sbr.rel (0) target = $region33
    $region32: #{tpu_custom_call.1} parent=1 // pred_region
      %s92 = ssub.s32 128, 128
      %93 = vsyncadd [#allocation4], %s92
      %s95 = sshll.u32 [#allocation8], 4
      %s96 = int_to_ptr.vmem [resolvable:$true] %s95
      %98 = dma.vmem_to_hbm [thread:$0]  %s96, 128, %s3, [#allocation4]
    $region33: #{tpu_custom_call.1} parent=1 // pred_fallthru
      _
    // Predicated region
    $region34: #{tpu_custom_call.1} parent=1 // pred_check
      _
    $region35: #{tpu_custom_call.1} parent=1 // pred_check_branch
      %100 = sbr.rel (0) target = $region37
    $region36: #{tpu_custom_call.1} parent=1 // pred_region
      %101 = dma.done [#allocation4], 128
    $region37: #{tpu_custom_call.1} parent=1 // pred_fallthru
      _
    %102 = vsyncpa [#allocation3], 1
    %103 = vsyncpa [#allocation6], 1
    %104 = vsyncpa [#allocation4], 1

</llo_original>
